<compile_context>
chip_gen: v5e
topology: v5e:2x2
jax: 0.10.0
libtpu: 0.0.40
codegen_flags: <defaults>
</compile_context>

<pallas_src>
import functools

import jax
import jax.numpy as jnp
from jax import lax
from jax.experimental import pallas as pl
from jax.experimental.pallas import tpu as pltpu


def _cdiv(a, b):
    return (a + b - 1) // b


# Budgets (f32-equivalent bytes per input block; conservative so that even a
# fully-materialized elementwise chain stays well under the VMEM limit).
_TARGET_F32_BLOCK_BYTES = 4 * 1024 * 1024
_VMEM_LIMIT_BYTES = 48 * 1024 * 1024


def _sse_kernel(o_ref, t_ref, sse_ref, *, n_inner, tile_d, true_d, needs_mask):
    """Accumulate per-sample sum of squared errors over the inner D axis."""
    i = pl.program_id(2)

    @pl.when(i == 0)
    def _init():
        sse_ref[...] = jnp.zeros_like(sse_ref)

    diff = o_ref[...].astype(jnp.float32) - t_ref[...].astype(jnp.float32)
    sq = diff * diff
    if needs_mask:
        # Mask the ragged tail of the last D tile instead of padding inputs in
        # HBM.  Also zeroes the (clamped) duplicate tile of an uneven
        # D_outer split, since its columns land at >= true_d.
        d_idx = pl.program_id(1) * n_inner + i
        col = d_idx * tile_d + lax.broadcasted_iota(jnp.int32, sq.shape, 1)
        sq = jnp.where(col < true_d, sq, 0.0)
    sse_ref[...] += jnp.sum(sq, axis=-1, keepdims=True)[None]


def psnr_pallas(outputs, targets, max_val: float = 1.0):
    """outputs, targets: (N, C, H, W) arrays. Returns scalar PSNR (float32)."""
    assert outputs.shape == targets.shape
    N, C, H, W = outputs.shape
    D = C * H * W

    o2 = outputs.reshape(N, D)
    t2 = targets.reshape(N, D)

    itemsize = int(jnp.dtype(outputs.dtype).itemsize)
    # Native sublane packing: 8 rows (32-bit), 16 (16-bit), 32 (8-bit).
    tb_base = {4: 8, 2: 16, 1: 32}.get(itemsize, 8)

    # ---- D tiling (never pad D; ragged last tile handled in-kernel). ----
    # Budget in f32-equivalent bytes; VMEM rounds the sublane dim up to the
    # native packing, so size against tb_base rows even when N < tb_base.
    max_tile_d = max(128, (_TARGET_F32_BLOCK_BYTES // (tb_base * 4)) // 128 * 128)
    if D <= 128:
        tile_d = D                              # block == full D (layout-exempt)
    else:
        tile_d = min(max_tile_d, (D // 128) * 128)
    n_d = _cdiv(D, tile_d)

    # ---- batch tiling: dtype-dependent TB, grown (multiple of tb_base)
    # toward the block budget when D is small, never above N. ----
    if N < tb_base:
        tb = N                                  # block == full batch dim
    else:
        want = max(tb_base, _TARGET_F32_BLOCK_BYTES // max(1, tile_d * 4))
        want = max(tb_base, (want // tb_base) * tb_base)
        tb = min(want, (N // tb_base) * tb_base)
    n_b = _cdiv(N, tb)

    # ---- extra TensorCore parallelism for small batches: split the reduction
    # into a parallel D_outer axis and an arbitrary D_inner axis. ----
    n_outer = 2 if (n_b < 2 and n_d >= 2) else 1
    n_inner = _cdiv(n_d, n_outer)

    needs_mask = (D % tile_d != 0) or (n_outer * n_inner != n_d)

    if n_outer * n_inner == n_d:
        in_map = lambda b, o, i: (b, o * n_inner + i)
    else:
        # Clamp the single overhanging step to the last valid tile; its
        # contribution is zeroed by the in-kernel mask.
        in_map = lambda b, o, i: (b, jnp.minimum(o * n_inner + i, n_d - 1))

    kernel = functools.partial(
        _sse_kernel,
        n_inner=n_inner,
        tile_d=tile_d,
        true_d=D,
        needs_mask=needs_mask,
    )

    sse = pl.pallas_call(
        kernel,
        out_shape=jax.ShapeDtypeStruct((n_outer, n_b * tb, 1), jnp.float32),
        grid_spec=pltpu.PrefetchScalarGridSpec(
            num_scalar_prefetch=0,
            grid=(n_b, n_outer, n_inner),
            in_specs=[
                pl.BlockSpec((tb, tile_d), in_map),
                pl.BlockSpec((tb, tile_d), in_map),
            ],
            out_specs=pl.BlockSpec((1, tb, 1), lambda b, o, i: (o, b, 0)),
        ),
        compiler_params=pltpu.CompilerParams(
            # Batch and D_outer blocks are independent -> shardable across
            # TensorCores (2x on v7x); D_inner is the reduction axis, last.
            dimension_semantics=("parallel", "parallel", "arbitrary"),
            vmem_limit_bytes=_VMEM_LIMIT_BYTES,
        ),
    )(o2, t2)

    # Tiny epilogue over a handful of scalars: sum D_outer partials, drop
    # padded batch rows, divide by the TRUE D, log10, mean.
    sse_n = jnp.sum(sse[:, :N, 0], axis=0)                 # (N,)
    mse = sse_n / jnp.float32(D)
    psnr = 10.0 * jnp.log10(jnp.float32(max_val ** 2) / mse)
    return jnp.mean(psnr)


def psnr_ref(outputs, targets, max_val: float = 1.0):
    mse = jnp.mean((outputs - targets) ** 2, axis=(1, 2, 3))
    psnr = 10.0 * jnp.log10((max_val ** 2) / mse)
    return jnp.mean(psnr)


if __name__ == "__main__":
    key = jax.random.PRNGKey(0)
    k1, k2, k3, k4, k5, k6 = jax.random.split(key, 6)

    # Primary small test (NCHW images implied by the module): aligned D.
    N, C, H, W = 2, 4, 16, 16
    outputs = jax.random.uniform(k1, (N, C, H, W), dtype=jnp.float32)
    targets = jax.random.uniform(k2, (N, C, H, W), dtype=jnp.float32)
    result = jax.block_until_ready(psnr_pallas(outputs, targets, max_val=1.0))
    expected = psnr_ref(outputs, targets, max_val=1.0)
    assert jnp.allclose(result, expected, rtol=1e-5, atol=1e-5), (result, expected)

    # Ragged case: D < 128 and N < 8 (full-array blocks, no masking).
    N2, C2, H2, W2 = 3, 3, 5, 7
    o_r = jax.random.uniform(k3, (N2, C2, H2, W2), dtype=jnp.float32)
    t_r = jax.random.uniform(k4, (N2, C2, H2, W2), dtype=jnp.float32)
    result2 = jax.block_until_ready(psnr_pallas(o_r, t_r, max_val=1.0))
    expected2 = psnr_ref(o_r, t_r, max_val=1.0)
    assert jnp.allclose(result2, expected2, rtol=1e-5, atol=1e-5), (result2, expected2)

    # Multi-tile case exercising the in-kernel ragged-D mask and the parallel
    # D_outer split (D = 4800 is not a multiple of the 128-aligned tile).
    N3, C3, H3, W3 = 2, 3, 40, 40
    o_m = jax.random.uniform(k5, (N3, C3, H3, W3), dtype=jnp.float32)
    t_m = jax.random.uniform(k6, (N3, C3, H3, W3), dtype=jnp.float32)
    result3 = jax.block_until_ready(psnr_pallas(o_m, t_m, max_val=1.0))
    expected3 = psnr_ref(o_m, t_m, max_val=1.0)
    assert jnp.allclose(result3, expected3, rtol=1e-5, atol=1e-5), (result3, expected3)

    print("KERNEL_OK")
</pallas_src>

<mosaic_0001>
module attributes {stable_mosaic.version = 11 : i64} {
  func.func @_sse_kernel(%arg0: i32, %arg1: i32, %arg2: i32, %arg3: memref<2x1024xf32, #tpu.memory_space<vmem>>, %arg4: memref<2x1024xf32, #tpu.memory_space<vmem>>, %arg5: memref<1x2x1xf32, #tpu.memory_space<vmem>>) attributes {dimension_semantics = [#tpu.dimension_semantics<parallel>, #tpu.dimension_semantics<parallel>, #tpu.dimension_semantics<arbitrary>], iteration_bounds = array<i64: 1, 1, 1>, scalar_prefetch = 0 : i64, scratch_operands = 0 : i64, tpu.core_type = #tpu.core_type<tc>, window_params = [{transform_indices = @transform_0, window_bounds = array<i64: 2, 1024>}, {transform_indices = @transform_1, window_bounds = array<i64: 2, 1024>}, {transform_indices = @transform_2, window_bounds = array<i64: 1, 2, 1>}]} {
    %c0_i32 = arith.constant 0 : i32
    %0 = arith.cmpi eq, %arg2, %c0_i32 : i32
    %1 = arith.extui %0 : i1 to i32
    %c0_i32_0 = arith.constant 0 : i32
    %2 = arith.cmpi ne, %1, %c0_i32_0 : i32
    scf.if %2 {
      %cst_10 = arith.constant 0.000000e+00 : f32
      %13 = vector.broadcast %cst_10 : f32 to vector<1x2x1xf32>
      %c0_11 = arith.constant 0 : index
      %c0_12 = arith.constant 0 : index
      %c0_13 = arith.constant 0 : index
      %14 = vector.load %arg5[%c0_11, %c0_12, %c0_13] : memref<1x2x1xf32, #tpu.memory_space<vmem>>, vector<1x2x1xf32>
      tpu.vector_store %arg5[%c0_11, %c0_12, %c0_13], %13 {strides = array<i32>} : memref<1x2x1xf32, #tpu.memory_space<vmem>>, vector<1x2x1xf32>,
    } else {
    }
    %c0 = arith.constant 0 : index
    %c0_1 = arith.constant 0 : index
    %3 = vector.load %arg3[%c0, %c0_1] : memref<2x1024xf32, #tpu.memory_space<vmem>>, vector<2x1024xf32>
    %c0_2 = arith.constant 0 : index
    %c0_3 = arith.constant 0 : index
    %4 = vector.load %arg4[%c0_2, %c0_3] : memref<2x1024xf32, #tpu.memory_space<vmem>>, vector<2x1024xf32>
    %5 = arith.subf %3, %4 : vector<2x1024xf32>
    %6 = arith.mulf %5, %5 : vector<2x1024xf32>
    %c0_4 = arith.constant 0 : index
    %c0_5 = arith.constant 0 : index
    %c0_6 = arith.constant 0 : index
    %7 = vector.load %arg5[%c0_4, %c0_5, %c0_6] : memref<1x2x1xf32, #tpu.memory_space<vmem>>, vector<1x2x1xf32>
    %cst = arith.constant dense<0.000000e+00> : vector<2xf32>
    %8 = vector.multi_reduction <add>, %6, %cst [1] : vector<2x1024xf32> to vector<2xf32>
    %9 = vector.shape_cast %8 : vector<2xf32> to vector<2x1xf32>
    %10 = vector.shape_cast %9 : vector<2x1xf32> to vector<1x2x1xf32>
    %11 = arith.addf %7, %10 : vector<1x2x1xf32>
    %c0_7 = arith.constant 0 : index
    %c0_8 = arith.constant 0 : index
    %c0_9 = arith.constant 0 : index
    %12 = vector.load %arg5[%c0_7, %c0_8, %c0_9] : memref<1x2x1xf32, #tpu.memory_space<vmem>>, vector<1x2x1xf32>
    tpu.vector_store %arg5[%c0_7, %c0_8, %c0_9], %11 {strides = array<i32>} : memref<1x2x1xf32, #tpu.memory_space<vmem>>, vector<1x2x1xf32>,
    return
  }
  func.func @transform_0(%arg0: i32, %arg1: i32, %arg2: i32) -> (i32, i32) {
    %c1_i32 = arith.constant 1 : i32
    %0 = arith.muli %arg1, %c1_i32 : i32
    %1 = arith.addi %0, %arg2 : i32
    %c0_i32 = arith.constant 0 : i32
    return %arg0, %1 : i32, i32
  }
  func.func @transform_1(%arg0: i32, %arg1: i32, %arg2: i32) -> (i32, i32) {
    %c1_i32 = arith.constant 1 : i32
    %0 = arith.muli %arg1, %c1_i32 : i32
    %1 = arith.addi %0, %arg2 : i32
    %c0_i32 = arith.constant 0 : i32
    return %arg0, %1 : i32, i32
  }
  func.func @transform_2(%arg0: i32, %arg1: i32, %arg2: i32) -> (i32, i32, i32) {
    %c0_i32 = arith.constant 0 : i32
    %c0_i32_0 = arith.constant 0 : i32
    return %arg1, %arg0, %c0_i32 : i32, i32, i32
  }
}

</mosaic_0001>

<llo_original>
// kernel: tpu_custom_call.1
$region0: #{tpu_custom_call.1}
  #allocation0 [shape = 'u32[]', space=smem, size = 0x4, offset = 0x4, fixed_abs, tag = 'smem constant byte address 0x4 - core index']
  #allocation1 [shape = 'u32[72,128]{1,0:T(1,128)}', space=vmem, size = 0x9000, scoped, tag = 'internal scratch']
  %s0 = inlined_call_operand.hbm [shape: f32[2,1024], index: 0, kind: input, shape index: {}]
  %s1 = inlined_call_operand.hbm [shape: f32[2,1024], index: 1, kind: input, shape index: {}]
  %s2 = inlined_call_operand.vmem [shape: f32[1,2,1], index: 2, kind: output, shape index: {}]
  %s3 = sld [smem:[#allocation0]]
  $region30: #{tpu_custom_call.1} parent=0
    _
  %s5 = ssub.s32 1, %s3
  %s6 = scalar_select 0, %s5, %s3
  $region1: #{tpu_custom_call.1} parent=0
    #allocation2 [shape = 'u8[8192]{0}', space=vmem, size = 0x2000, scoped, tag = 'input window, operand 0, single buffered']
    #allocation3 [shape = 's32[1]{0}', space=sflag, size = 0x4, scoped, tag = 'scoped memory for tpu_custom_call.1']
    #allocation4 [shape = 'u8[8192]{0}', space=vmem, size = 0x2000, scoped, tag = 'input window, operand 1, single buffered']
    #allocation5 [shape = 's32[1]{0}', space=sflag, size = 0x4, scoped, tag = 'scoped memory for tpu_custom_call.1']
    %7 = vsyncpa [#allocation3], 0
    %8 = vsyncpa [#allocation5], 0
    // Predicated region
    $region2: #{tpu_custom_call.1} parent=1 // pred_check
      _
    $region3: #{tpu_custom_call.1} parent=1 // pred_check_branch
      %10 = sbr.rel (0) target = $region5
    $region4: #{tpu_custom_call.1} parent=1 // pred_region
      %s11 = sadd.s32 0, 0
      %s12 = smul.u32 8, %s11
      %14 = vsyncadd [#allocation3], 0
      %s15 = smul.addr %s12, 2
      %s16 = scalar_lea.hbm %s0, %s15
      %s18 = sshll.u32 %s16, 4
      %s19 = int_to_ptr.hbm [resolvable:$true] %s18
      %s20 = sshll.u32 [#allocation2], 4
      %s21 = int_to_ptr.vmem [resolvable:$true] %s20
      %23 = dma.hbm_to_vmem [thread:$0]  %s19, 256, %s21, [#allocation3]
    $region5: #{tpu_custom_call.1} parent=1 // pred_fallthru
      _
    // Predicated region
    $region6: #{tpu_custom_call.1} parent=1 // pred_check
      _
    $region7: #{tpu_custom_call.1} parent=1 // pred_check_branch
      %25 = sbr.rel (0) target = $region9
    $region8: #{tpu_custom_call.1} parent=1 // pred_region
      %s26 = sadd.s32 0, 0
      %s27 = smul.u32 8, %s26
      %29 = vsyncadd [#allocation5], 0
      %s30 = smul.addr %s27, 2
      %s31 = scalar_lea.hbm %s1, %s30
      %s33 = sshll.u32 %s31, 4
      %s34 = int_to_ptr.hbm [resolvable:$true] %s33
      %s35 = sshll.u32 [#allocation4], 4
      %s36 = int_to_ptr.vmem [resolvable:$true] %s35
      %38 = dma.hbm_to_vmem [thread:$0]  %s34, 256, %s36, [#allocation5]
    $region9: #{tpu_custom_call.1} parent=1 // pred_fallthru
      _
    // Predicated region
    $region10: #{tpu_custom_call.1} parent=1 // pred_check
      _
    $region11: #{tpu_custom_call.1} parent=1 // pred_check_branch
      %40 = sbr.rel (0) target = $region13
    $region12: #{tpu_custom_call.1} parent=1 // pred_region
      %42 = dma.done [#allocation3], 256
    $region13: #{tpu_custom_call.1} parent=1 // pred_fallthru
      _
    // Predicated region
    $region14: #{tpu_custom_call.1} parent=1 // pred_check
      _
    $region15: #{tpu_custom_call.1} parent=1 // pred_check_branch
      %44 = sbr.rel (0) target = $region17
    $region16: #{tpu_custom_call.1} parent=1 // pred_region
      %46 = dma.done [#allocation5], 256
    $region17: #{tpu_custom_call.1} parent=1 // pred_fallthru
      _
    %s47 = sadd.s32 0, 0
    %s48 = smul.u32 8, %s47
    %s49 = sadd.s32 0, 0
    %s50 = smul.u32 8, %s49
    %p51 = scmp.eq.s32.totalorder 0, 0
    // Predicated region
    $region18: #{tpu_custom_call.1} parent=1 // pred_check
      %p52 = pneg %p51
    $region19: #{tpu_custom_call.1} parent=1 // pred_check_branch
      %54 = sbr.rel (%p52) target = $region21
    $region20: #{tpu_custom_call.1} parent=1 // pred_region
      %vm55 = vcmask 1024
      %56 = vst.msk [vmem:[%s2] sm:$0x3] %vm55, 0.0
    $region21: #{tpu_custom_call.1} parent=1 // pred_fallthru
      _
    %v57 = vld [vmem:[#allocation2] sm:$0xff]
    %v58 = vld [vmem:[#allocation2 + $0x8] sm:$0xff]
    %v59 = vld [vmem:[#allocation4] sm:$0xff]
    %v60 = vld [vmem:[#allocation4 + $0x8] sm:$0xff]
    %v61 = vsub.f32 %v57, %v59
    %v62 = vsub.f32 %v58, %v60
    %v63 = vmul.f32 %v61, %v61
    %v64 = vmul.f32 %v62, %v62
    %v65 = vld [vmem:[%s2] sm:$0x3]
    %68 = vst [vmem:[#allocation1] ss:$4 sm:$0xff] %v63
    %s69 = scalar_lea.vmem [#allocation1], 32
    %70 = vst [vmem:[%s69] ss:$4 sm:$0xff] %v64
    %v71 = vld.sshfl [vmem:[#allocation1] sm:$0xff pattern:$0x73625140]
    %v72 = vld.sshfl [vmem:[#allocation1 + $0x8] sm:$0xff pattern:$0x73625140]
    %v73 = vld.sshfl [vmem:[#allocation1 + $0x10] sm:$0xff pattern:$0x73625140]
    %v74 = vld.sshfl [vmem:[#allocation1 + $0x18] sm:$0xff pattern:$0x73625140]
    %v75 = vld.sshfl [vmem:[#allocation1 + $0x20] sm:$0xff pattern:$0x73625140]
    %v76 = vld.sshfl [vmem:[#allocation1 + $0x28] sm:$0xff pattern:$0x73625140]
    %v77 = vld.sshfl [vmem:[#allocation1 + $0x30] sm:$0xff pattern:$0x73625140]
    %v78 = vld.sshfl [vmem:[#allocation1 + $0x38] sm:$0xff pattern:$0x73625140]
    %vm87 = vcmask 1041408
    %v88 = vsel %vm87, %v71, 0.0
    %v89 = vsel %vm87, %v72, 0.0
    %v90 = vadd.f32 %v88, %v89
    %v91 = vsel %vm87, %v73, 0.0
    %v92 = vadd.f32 %v90, %v91
    %v93 = vsel %vm87, %v74, 0.0
    %v94 = vadd.f32 %v92, %v93
    %v95 = vsel %vm87, %v75, 0.0
    %v96 = vadd.f32 %v94, %v95
    %v97 = vsel %vm87, %v76, 0.0
    %v98 = vadd.f32 %v96, %v97
    %v99 = vsel %vm87, %v77, 0.0
    %v100 = vadd.f32 %v98, %v99
    %v101 = vsel %vm87, %v78, 0.0
    %v102 = vadd.f32 %v100, %v101
    %103 = vadd.xlane.f32.xlu0 %v102
    %v104 = vpop.xlane.xlu0 %103
    %v105 = vadd.f32 %v65, %v104
    %vm106 = vcmask 1024
    %107 = vst.msk [vmem:[%s2] sm:$0x3] %vm106, %v105
    // Predicated region
    $region22: #{tpu_custom_call.1} parent=1 // pred_check
      _
    $region23: #{tpu_custom_call.1} parent=1 // pred_check_branch
      %109 = sbr.rel (0) target = $region25
    $region24: #{tpu_custom_call.1} parent=1 // pred_region
      _
    $region25: #{tpu_custom_call.1} parent=1 // pred_fallthru
      _
    // Predicated region
    $region26: #{tpu_custom_call.1} parent=1 // pred_check
      _
    $region27: #{tpu_custom_call.1} parent=1 // pred_check_branch
      %111 = sbr.rel (0) target = $region29
    $region28: #{tpu_custom_call.1} parent=1 // pred_region
      _
    $region29: #{tpu_custom_call.1} parent=1 // pred_fallthru
      _
    %112 = vsyncpa [#allocation3], 1
    %113 = vsyncpa [#allocation5], 1

</llo_original>
